<compile_context>
chip_gen: v5e
topology: v5e:2x2
jax: 0.10.0
libtpu: 0.0.40
codegen_flags: <defaults>
</compile_context>

<pallas_src>
import jax
import jax.numpy as jnp
from jax.experimental import pallas as pl
from jax.experimental.pallas import tpu as pltpu

_LANE = 128
_SUBLANE_MULT = 32                  # covers f32 (8) / bf16 (16) / int8+fp8 (32) sublane tiles
_MAX_COLS = 8192                    # lane-dense slab -> unmasked vst, long HBM DMA bursts
_SINGLE_BLOCK_BYTES = 512 * 1024    # small-path cutoff (review: 256-512 KiB)
_TINY_RAGGED_BYTES = 64 * 1024      # only tensors below this may use a (1, n) block


def _identity_kernel(x_ref, o_ref):
    # Pure pass-through: VMEM tile load -> store.
    o_ref[...] = x_ref[...]


def _vmem_capacity_bytes():
    try:
        info = pltpu.get_tpu_info()
        cap = int(getattr(info, "vmem_capacity_bytes", 0))
        if cap > 0:
            return cap
    except Exception:
        pass
    return 64 * 1024 * 1024  # conservative default: assume v7x-sized VMEM


def _budgets():
    """(block_bytes, vmem_limit_bytes) sized per TPU generation."""
    cap = _vmem_capacity_bytes()
    if cap >= 96 * 1024 * 1024:
        # v5e / v6e: 128 MiB physical VMEM -> bigger blocks, fewer grid steps.
        return 16 * 1024 * 1024, 96 * 1024 * 1024
    # v7x: 64 MiB per TensorCore -> keep resident (2 in + 2 out buffers) ~32 MiB.
    return 8 * 1024 * 1024, 48 * 1024 * 1024


def _pick_cols(n):
    """Widest power-of-two lane width (multiple of 128) dividing n, keeping rows >= 64."""
    cols = _LANE
    while cols * 2 <= _MAX_COLS and n % (cols * 2) == 0 and n // (cols * 2) >= 64:
        cols *= 2
    return cols


def _single_block_copy(x2d):
    # Whole array is a single block (block == full array shape, so the (8,128)
    # block divisibility constraint does not apply). Used only for small slabs.
    return pl.pallas_call(
        _identity_kernel,
        out_shape=jax.ShapeDtypeStruct(x2d.shape, x2d.dtype),
    )(x2d)


def _tiled_copy(x2d, block_rows, vmem_limit):
    rows, cols = x2d.shape
    return pl.pallas_call(
        _identity_kernel,
        out_shape=jax.ShapeDtypeStruct((rows, cols), x2d.dtype),
        grid_spec=pltpu.PrefetchScalarGridSpec(
            num_scalar_prefetch=0,
            grid=(pl.cdiv(rows, block_rows),),
            in_specs=[pl.BlockSpec((block_rows, cols), lambda i: (i, 0))],
            out_specs=pl.BlockSpec((block_rows, cols), lambda i: (i, 0)),
        ),
        compiler_params=pltpu.CompilerParams(
            dimension_semantics=("parallel",),   # shard grid across TCs (v7x megacore)
            vmem_limit_bytes=vmem_limit,
        ),
    )(x2d)


def _copy_aligned(flat, n, itemsize):
    """Copy a flat array whose length is a multiple of 128. Returns flat output."""
    cols = _pick_cols(n)
    rows = n // cols
    x2d = flat.reshape(rows, cols)

    if n * itemsize <= _SINGLE_BLOCK_BYTES:
        # Small: one dense (rows, cols) block, single DMA in / out.
        return _single_block_copy(x2d).reshape(-1)

    block_bytes, vmem_limit = _budgets()
    budget_rows = max(
        _SUBLANE_MULT,
        (block_bytes // (cols * itemsize)) // _SUBLANE_MULT * _SUBLANE_MULT,
    )
    # Ensure at least 2 grid steps when possible so both v7x TensorCores'
    # DMA engines are used on mid-size tensors.
    half_rows = (rows // 2) // _SUBLANE_MULT * _SUBLANE_MULT
    if half_rows >= _SUBLANE_MULT:
        budget_rows = min(budget_rows, half_rows)
    block_rows = min(budget_rows, rows)
    return _tiled_copy(x2d, block_rows, vmem_limit).reshape(-1)


def net_forward(x):
    """Identity forward pass via a Pallas TPU copy kernel."""
    orig_shape = x.shape
    n = int(x.size)
    if n == 0:
        return x
    itemsize = jnp.dtype(x.dtype).itemsize
    flat = x.reshape(-1)

    tail = n % _LANE
    if tail == 0:
        return _copy_aligned(flat, n, itemsize).reshape(orig_shape)

    # Ragged numel (not a multiple of 128).
    if n * itemsize <= _TINY_RAGGED_BYTES:
        # Tiny: a single (1, n) block; sublane padding is bounded (< ~2 MiB VMEM).
        return _single_block_copy(flat.reshape(1, n)).reshape(orig_shape)

    # Large ragged: copy the 128-aligned prefix densely and the <128-element
    # tail with a tiny single-block copy (no full-array input padding, no
    # full-array output slice).
    # TODO(synk): fuse the tail into the last tiled block with a masked
    # pltpu.store to also avoid the residual output concatenate below.
    n_main = n - tail
    main_out = _copy_aligned(flat[:n_main], n_main, itemsize)
    tail_out = _single_block_copy(flat[n_main:].reshape(1, tail)).reshape(-1)
    return jnp.concatenate([main_out, tail_out]).reshape(orig_shape)


if __name__ == "__main__":
    key = jax.random.PRNGKey(0)
    # NCHW input consistent with the module: batch=2, channels=4, spatial=16x16.
    x = jax.random.normal(key, (2, 4, 16, 16), dtype=jnp.float32)

    y = net_forward(x)
    jax.block_until_ready(y)

    assert y.shape == x.shape and y.dtype == x.dtype
    assert bool(jnp.all(y == x))
    print("KERNEL_OK")
</pallas_src>

<mosaic_0001>
module attributes {stable_mosaic.version = 11 : i64} {
  func.func @_identity_kernel(%arg0: memref<16x128xf32, #tpu.memory_space<vmem>>, %arg1: memref<16x128xf32, #tpu.memory_space<vmem>>) attributes {dimension_semantics = [], scalar_prefetch = 0 : i64, scratch_operands = 0 : i64, tpu.core_type = #tpu.core_type<tc>} {
    %c0 = arith.constant 0 : index
    %c0_0 = arith.constant 0 : index
    %0 = vector.load %arg0[%c0, %c0_0] : memref<16x128xf32, #tpu.memory_space<vmem>>, vector<16x128xf32>
    %c0_1 = arith.constant 0 : index
    %c0_2 = arith.constant 0 : index
    %1 = vector.load %arg1[%c0_1, %c0_2] : memref<16x128xf32, #tpu.memory_space<vmem>>, vector<16x128xf32>
    tpu.vector_store %arg1[%c0_1, %c0_2], %0 {strides = array<i32>} : memref<16x128xf32, #tpu.memory_space<vmem>>, vector<16x128xf32>,
    return
  }
}

</mosaic_0001>

<llo_original>
// kernel: tpu_custom_call.1
$region0: #{tpu_custom_call.1}
  #allocation0 [shape = 'u32[]', space=smem, size = 0x4, offset = 0x4, fixed_abs, tag = 'smem constant byte address 0x4 - core index']
  #allocation1 [shape = 'u32[72,128]{1,0:T(1,128)}', space=vmem, size = 0x9000, scoped, tag = 'internal scratch']
  %s0 = inlined_call_operand.hbm [shape: f32[16,128], index: 0, kind: input, shape index: {}]
  %s1 = inlined_call_operand.hbm [shape: f32[16,128], index: 1, kind: output, shape index: {}]
  %s2 = sld [smem:[#allocation0]]
  $region18: #{tpu_custom_call.1} parent=0
    _
  %s4 = ssub.s32 1, %s2
  %s5 = scalar_select 0, %s4, %s2
  $region1: #{tpu_custom_call.1} parent=0
    #allocation2 [shape = 'u8[8192]{0}', space=vmem, size = 0x2000, scoped, tag = 'input window, operand 0, single buffered']
    #allocation3 [shape = 's32[1]{0}', space=sflag, size = 0x4, scoped, tag = 'scoped memory for tpu_custom_call.1']
    #allocation4 [shape = 's32[1]{0}', space=sflag, size = 0x4, scoped, tag = 'scoped memory for tpu_custom_call.1']
    #allocation5 [shape = 'u8[8192]{0}', space=vmem, size = 0x2000, scoped, tag = 'output window, operand 0, single buffered']
    %6 = vsyncpa [#allocation3], 0
    %7 = vsyncpa [#allocation4], 0
    // Predicated region
    $region2: #{tpu_custom_call.1} parent=1 // pred_check
      _
    $region3: #{tpu_custom_call.1} parent=1 // pred_check_branch
      %9 = sbr.rel (0) target = $region5
    $region4: #{tpu_custom_call.1} parent=1 // pred_region
      %11 = vsyncadd [#allocation3], 0
      %s12 = sshll.u32 %s0, 4
      %s13 = int_to_ptr.hbm [resolvable:$true] %s12
      %s14 = sshll.u32 [#allocation2], 4
      %s15 = int_to_ptr.vmem [resolvable:$true] %s14
      %20 = dma.hbm_to_vmem [thread:$0]  %s13, 256, %s15, [#allocation3], 128, 128, 8
    $region5: #{tpu_custom_call.1} parent=1 // pred_fallthru
      _
    // Predicated region
    $region6: #{tpu_custom_call.1} parent=1 // pred_check
      _
    $region7: #{tpu_custom_call.1} parent=1 // pred_check_branch
      %22 = sbr.rel (0) target = $region9
    $region8: #{tpu_custom_call.1} parent=1 // pred_region
      %24 = dma.done [#allocation3], 256
    $region9: #{tpu_custom_call.1} parent=1 // pred_fallthru
      _
    %v25 = vld [vmem:[#allocation2] sm:$0xff]
    %v26 = vld [vmem:[#allocation2 + $0x8] sm:$0xff]
    %27 = vst [vmem:[#allocation5] sm:$0xff] %v25
    %28 = vst [vmem:[#allocation5 + $0x8] sm:$0xff] %v26
    // Predicated region
    $region10: #{tpu_custom_call.1} parent=1 // pred_check
      _
    $region11: #{tpu_custom_call.1} parent=1 // pred_check_branch
      %30 = sbr.rel (0) target = $region13
    $region12: #{tpu_custom_call.1} parent=1 // pred_region
      %32 = vsyncadd [#allocation4], 0
      %s33 = sshll.u32 [#allocation5], 4
      %s34 = int_to_ptr.vmem [resolvable:$true] %s33
      %s35 = sshll.u32 %s1, 4
      %s36 = int_to_ptr.hbm [resolvable:$true] %s35
      %41 = dma.vmem_to_hbm [thread:$0]  %s34, 256, %s36, [#allocation4], 128, 128, 8
    $region13: #{tpu_custom_call.1} parent=1 // pred_fallthru
      _
    // Predicated region
    $region14: #{tpu_custom_call.1} parent=1 // pred_check
      _
    $region15: #{tpu_custom_call.1} parent=1 // pred_check_branch
      %43 = sbr.rel (0) target = $region17
    $region16: #{tpu_custom_call.1} parent=1 // pred_region
      %45 = dma.done [#allocation4], 256
    $region17: #{tpu_custom_call.1} parent=1 // pred_fallthru
      _
    %46 = vsyncpa [#allocation3], 1
    %47 = vsyncpa [#allocation4], 1

</llo_original>
